<compile_context>
chip_gen: v5e
topology: v5e:2x2
jax: 0.10.0
libtpu: 0.0.40
codegen_flags: <defaults>
</compile_context>

<pallas_src>
import functools

import numpy as np
import jax
import jax.numpy as jnp
from jax.experimental import pallas as pl
from jax.experimental.pallas import tpu as pltpu

EPS = 1e-6


# ---------------------------------------------------------------------------
# Tiny one-time probe: pin down pltpu.roll's shift convention so the pooling
# masks are always paired with the correct neighbour shift.
# "np convention" means roll(x, 1, axis=1)[..., s] == x[..., s-1].
# ---------------------------------------------------------------------------
@functools.lru_cache(maxsize=None)
def _roll_is_np_convention():
    def k(x_ref, o_ref):
        o_ref[...] = pltpu.roll(x_ref[...], 1, axis=1)

    x = jnp.arange(8 * 128, dtype=jnp.float32).reshape(8, 128)
    y = pl.pallas_call(k, out_shape=jax.ShapeDtypeStruct((8, 128), jnp.float32))(x)
    return bool(jax.device_get(y[0, 1]) == jax.device_get(x[0, 0]))


# ---------------------------------------------------------------------------
# Fused kernel: one grid step = (batch tile, layer).  The activation lives in
# the (revisited) output block across the depth axis.
# ---------------------------------------------------------------------------
def _metaformer_kernel(W, roll_fwd,
                       x_ref, masks_ref, icnt_ref,
                       g1_ref, b1_ref, rs1_ref,
                       g2_ref, b2_ref, rs2_ref,
                       w1_ref, c1_ref, w2_ref, c2_ref,
                       o_ref):
    d = pl.program_id(1)

    # Layer 0: seed the resident activation block from the input.
    @pl.when(d == 0)
    def _():
        o_ref[...] = x_ref[...]

    x = o_ref[...].astype(jnp.float32)          # (C, Sp), resident across depth
    Sp = x.shape[1]

    ml = masks_ref[0:1, :]                       # j > 0     (left  neighbour valid)
    mr = masks_ref[1:2, :]                       # j < W-1   (right neighbour valid)
    mu = masks_ref[2:3, :]                       # i > 0     (up    neighbour valid)
    md = masks_ref[3:4, :]                       # i < H-1   (down  neighbour valid)
    inv_cnt = icnt_ref[...]                      # 1 / (#valid cells in 3x3 window)

    # Shift amounts that bring x[s-1] / x[s+1] / x[s-W] / x[s+W] to lane s.
    sh_prev = 1 if roll_fwd else Sp - 1
    sh_next = Sp - 1 if roll_fwd else 1
    sh_up = W if roll_fwd else Sp - W
    sh_down = Sp - W if roll_fwd else W

    def chan_ln(v, g, b):
        # LayerNorm over channels (axis 0) per pixel; single-pass statistics.
        mu_ = jnp.mean(v, axis=0, keepdims=True)
        ms_ = jnp.mean(v * v, axis=0, keepdims=True)
        var = jnp.maximum(ms_ - mu_ * mu_, 0.0)
        return (v - mu_) * jax.lax.rsqrt(var + EPS) * g + b

    def avgpool3(v):
        # Separable 3x3 avg pool (stride 1, pad 1, count_include_pad=False):
        # masked neighbour sums along W then H, then multiply by 1/count.
        row = (v + ml * pltpu.roll(v, sh_prev, axis=1)
                 + mr * pltpu.roll(v, sh_next, axis=1))
        col = (row + mu * pltpu.roll(row, sh_up, axis=1)
                   + md * pltpu.roll(row, sh_down, axis=1))
        return col * inv_cnt

    # --- token-mixer branch: x = rs1*x + (avgpool3(norm(x)) - norm(x)) -------
    xn = chan_ln(x, g1_ref[...], b1_ref[...])
    x = rs1_ref[...] * x + (avgpool3(xn) - xn)

    # --- MLP branch: x = rs2*x + W2 @ ReLU(W1 @ norm(x) + c1)^2 + c2 ---------
    xn2 = chan_ln(x, g2_ref[...], b2_ref[...])
    h = jnp.dot(w1_ref[...], xn2, preferred_element_type=jnp.float32) + c1_ref[...]
    h = jnp.maximum(h, 0.0)
    h = h * h                                    # ReLUSquared
    y = jnp.dot(w2_ref[...], h, preferred_element_type=jnp.float32) + c2_ref[...]
    x = rs2_ref[...] * x + y

    o_ref[...] = x.astype(o_ref.dtype)


# ---------------------------------------------------------------------------
# Host-side helpers
# ---------------------------------------------------------------------------
def _pool_aux(H, W, Bp):
    """Boundary masks (4, Bp*S) and reciprocal counts (1, Bp*S) for the pool."""
    j = np.arange(W)
    i = np.arange(H)
    ml = (j > 0).astype(np.float32)
    mr = (j < W - 1).astype(np.float32)
    mu = (i > 0).astype(np.float32)
    md = (i < H - 1).astype(np.float32)
    cnt = (1.0 + mu + md)[:, None] * (1.0 + ml + mr)[None, :]       # (H, W)
    masks = np.stack([
        np.tile(ml[None, :], (H, 1)).reshape(-1),
        np.tile(mr[None, :], (H, 1)).reshape(-1),
        np.tile(mu[:, None], (1, W)).reshape(-1),
        np.tile(md[:, None], (1, W)).reshape(-1),
    ], axis=0)                                                      # (4, S)
    inv_cnt = (1.0 / cnt).reshape(1, -1)                            # (1, S)
    return (jnp.asarray(np.tile(masks, (1, Bp)), jnp.float32),
            jnp.asarray(np.tile(inv_cnt, (1, Bp)), jnp.float32))


def _choose_batch_pack(B, S, max_lanes=2048):
    """Pack Bp images into the lane axis; keep >=2 parallel grid steps when B>1."""
    for bp in range(max(B // 2, 1), 0, -1):
        if B % bp == 0 and bp * S <= max_lanes:
            return bp
    return 1


def metaformer_block(x_nchw, params):
    B, C, H, W = x_nchw.shape
    S = H * W
    depth, Ce, _ = params["w1"].shape

    Bp = _choose_batch_pack(B, S)
    Bt = B // Bp
    Sp = Bp * S

    masks, inv_cnt = _pool_aux(H, W, Bp)

    # (B, C, H, W) -> (Bt, C, Bp*S): pack Bp images along the lane/spatial axis.
    x = x_nchw.reshape(Bt, Bp, C, S).transpose(0, 2, 1, 3).reshape(Bt, C, Sp)

    def col(p):                                   # (depth, n) -> (depth, n, 1)
        return p.reshape(depth, -1, 1)

    def xmap(bt, d):                              # activation: per batch tile
        return (bt, 0, 0)

    def wmap(bt, d):                              # per-layer weights
        return (d, 0, 0)

    def cmap(bt, d):                              # grid-invariant constants
        return (0, 0)

    in_specs = [
        pl.BlockSpec((None, C, Sp), xmap),        # x (read once per batch tile)
        pl.BlockSpec((4, Sp), cmap),              # pooling boundary masks
        pl.BlockSpec((1, Sp), cmap),              # pooling 1/count map
        pl.BlockSpec((None, C, 1), wmap),         # g1
        pl.BlockSpec((None, C, 1), wmap),         # b1
        pl.BlockSpec((None, C, 1), wmap),         # res_scale_mixer
        pl.BlockSpec((None, C, 1), wmap),         # g2
        pl.BlockSpec((None, C, 1), wmap),         # b2
        pl.BlockSpec((None, C, 1), wmap),         # res_scale_mlp
        pl.BlockSpec((None, Ce, C), wmap),        # w1 (1x1 conv C -> Ce)
        pl.BlockSpec((None, Ce, 1), wmap),        # c1
        pl.BlockSpec((None, C, Ce), wmap),        # w2 (1x1 conv Ce -> C)
        pl.BlockSpec((None, C, 1), wmap),         # c2
    ]

    out = pl.pallas_call(
        functools.partial(_metaformer_kernel, W, _roll_is_np_convention()),
        out_shape=jax.ShapeDtypeStruct((Bt, C, Sp), x_nchw.dtype),
        grid=(Bt, depth),
        in_specs=in_specs,
        out_specs=pl.BlockSpec((None, C, Sp), xmap),
        compiler_params=pltpu.CompilerParams(
            dimension_semantics=("parallel", "arbitrary")),
    )(x, masks, inv_cnt,
      col(params["g1"]), col(params["b1"]), col(params["rs_mixer"]),
      col(params["g2"]), col(params["b2"]), col(params["rs_mlp"]),
      params["w1"], col(params["c1"]), params["w2"], col(params["c2"]))

    return out.reshape(Bt, C, Bp, S).transpose(0, 2, 1, 3).reshape(B, C, H, W)


# ---------------------------------------------------------------------------
# Pure-JAX reference (NCHW), for correctness check
# ---------------------------------------------------------------------------
def ref_forward(x, params):
    B, C, H, W = x.shape

    def chan_ln(v, g, b):
        mu = jnp.mean(v, axis=1, keepdims=True)
        var = jnp.mean((v - mu) ** 2, axis=1, keepdims=True)
        return (v - mu) * jax.lax.rsqrt(var + EPS) * g[None, :, None, None] \
            + b[None, :, None, None]

    def avgpool3(v):
        vp = jnp.pad(v, ((0, 0), (0, 0), (1, 1), (1, 1)))
        s = sum(vp[:, :, a:a + H, b:b + W] for a in range(3) for b in range(3))
        ones = jnp.ones((1, 1, H, W), v.dtype)
        op = jnp.pad(ones, ((0, 0), (0, 0), (1, 1), (1, 1)))
        cnt = sum(op[:, :, a:a + H, b:b + W] for a in range(3) for b in range(3))
        return s / cnt

    depth = params["w1"].shape[0]
    for i in range(depth):
        xn = chan_ln(x, params["g1"][i], params["b1"][i])
        x = params["rs_mixer"][i][None, :, None, None] * x + (avgpool3(xn) - xn)
        xn2 = chan_ln(x, params["g2"][i], params["b2"][i])
        h = jnp.einsum("oc,bchw->bohw", params["w1"][i], xn2) \
            + params["c1"][i][None, :, None, None]
        h = jnp.maximum(h, 0.0) ** 2
        y = jnp.einsum("oc,bchw->bohw", params["w2"][i], h) \
            + params["c2"][i][None, :, None, None]
        x = params["rs_mlp"][i][None, :, None, None] * x + y
    return x


# ---------------------------------------------------------------------------
if __name__ == "__main__":
    key = jax.random.PRNGKey(0)
    B, C, H, W = 2, 4, 16, 16
    depth = 2
    expansion = 4
    Ce = C * expansion

    keys = jax.random.split(key, 5)
    x = jax.random.normal(keys[0], (B, C, H, W), jnp.float32)

    # Deterministic parameter init (shapes follow the module __init__):
    #  - norm weights: ones / zeros; res_scale_*: ones (as in __init__)
    #  - 1x1 conv weights/biases: deterministic random
    params = {
        "g1": jnp.ones((depth, C), jnp.float32),
        "b1": jnp.zeros((depth, C), jnp.float32),
        "g2": jnp.ones((depth, C), jnp.float32),
        "b2": jnp.zeros((depth, C), jnp.float32),
        "rs_mixer": jnp.ones((depth, C), jnp.float32),
        "rs_mlp": jnp.ones((depth, C), jnp.float32),
        "w1": 0.1 * jax.random.normal(keys[1], (depth, Ce, C), jnp.float32),
        "c1": 0.1 * jax.random.normal(keys[2], (depth, Ce), jnp.float32),
        "w2": 0.1 * jax.random.normal(keys[3], (depth, C, Ce), jnp.float32),
        "c2": 0.1 * jax.random.normal(keys[4], (depth, C), jnp.float32),
    }

    out = metaformer_block(x, params)
    out = jax.block_until_ready(out)

    ref = ref_forward(x, params)
    assert out.shape == (B, C, H, W)
    np.testing.assert_allclose(np.asarray(out), np.asarray(ref),
                               rtol=1e-4, atol=1e-4)
    print("KERNEL_OK")
</pallas_src>

<mosaic_0001>
module attributes {stable_mosaic.version = 11 : i64} {
  func.func @k(%arg0: memref<8x128xf32, #tpu.memory_space<vmem>>, %arg1: memref<8x128xf32, #tpu.memory_space<vmem>>) attributes {dimension_semantics = [], scalar_prefetch = 0 : i64, scratch_operands = 0 : i64, tpu.core_type = #tpu.core_type<tc>} {
    %c0 = arith.constant 0 : index
    %c0_0 = arith.constant 0 : index
    %0 = vector.load %arg0[%c0, %c0_0] : memref<8x128xf32, #tpu.memory_space<vmem>>, vector<8x128xf32>
    %c1_i32 = arith.constant 1 : i32
    %1 = tpu.dynamic_rotate %0 by %c1_i32 dim 1 : vector<8x128xf32>, i32 -> vector<8x128xf32>
    %c0_1 = arith.constant 0 : index
    %c0_2 = arith.constant 0 : index
    %2 = vector.load %arg1[%c0_1, %c0_2] : memref<8x128xf32, #tpu.memory_space<vmem>>, vector<8x128xf32>
    tpu.vector_store %arg1[%c0_1, %c0_2], %1 {strides = array<i32>} : memref<8x128xf32, #tpu.memory_space<vmem>>, vector<8x128xf32>,
    return
  }
}

</mosaic_0001>

<llo_original>
// kernel: tpu_custom_call.1
$region0: #{tpu_custom_call.1}
  #allocation0 [shape = 'u32[]', space=smem, size = 0x4, offset = 0x4, fixed_abs, tag = 'smem constant byte address 0x4 - core index']
  #allocation1 [shape = 'u32[72,128]{1,0:T(1,128)}', space=vmem, size = 0x9000, scoped, tag = 'internal scratch']
  %s0 = inlined_call_operand.hbm [shape: f32[8,128], index: 0, kind: input, shape index: {}]
  %s1 = inlined_call_operand.hbm [shape: f32[8,128], index: 1, kind: output, shape index: {}]
  %s2 = sld [smem:[#allocation0]]
  $region18: #{tpu_custom_call.1} parent=0
    _
  %s4 = ssub.s32 1, %s2
  %s5 = scalar_select 0, %s4, %s2
  $region1: #{tpu_custom_call.1} parent=0
    #allocation2 [shape = 'u8[4096]{0}', space=vmem, size = 0x1000, scoped, tag = 'input window, operand 0, single buffered']
    #allocation3 [shape = 's32[1]{0}', space=sflag, size = 0x4, scoped, tag = 'scoped memory for tpu_custom_call.1']
    #allocation4 [shape = 's32[1]{0}', space=sflag, size = 0x4, scoped, tag = 'scoped memory for tpu_custom_call.1']
    #allocation5 [shape = 'u8[4096]{0}', space=vmem, size = 0x1000, scoped, tag = 'output window, operand 0, single buffered']
    %6 = vsyncpa [#allocation3], 0
    %7 = vsyncpa [#allocation4], 0
    // Predicated region
    $region2: #{tpu_custom_call.1} parent=1 // pred_check
      _
    $region3: #{tpu_custom_call.1} parent=1 // pred_check_branch
      %9 = sbr.rel (0) target = $region5
    $region4: #{tpu_custom_call.1} parent=1 // pred_region
      %11 = vsyncadd [#allocation3], 0
      %s13 = sshll.u32 %s0, 4
      %s14 = int_to_ptr.hbm [resolvable:$true] %s13
      %s15 = sshll.u32 [#allocation2], 4
      %s16 = int_to_ptr.vmem [resolvable:$true] %s15
      %18 = dma.hbm_to_vmem [thread:$0]  %s14, 128, %s16, [#allocation3]
    $region5: #{tpu_custom_call.1} parent=1 // pred_fallthru
      _
    // Predicated region
    $region6: #{tpu_custom_call.1} parent=1 // pred_check
      _
    $region7: #{tpu_custom_call.1} parent=1 // pred_check_branch
      %20 = sbr.rel (0) target = $region9
    $region8: #{tpu_custom_call.1} parent=1 // pred_region
      %22 = dma.done [#allocation3], 128
    $region9: #{tpu_custom_call.1} parent=1 // pred_fallthru
      _
    %v23 = vld [vmem:[#allocation2] sm:$0xff]
    %24 = vrot.lane.b32.xlu0 %v23, 1
    %v25 = vpop.permute.xlu0 %24
    %26 = vst [vmem:[#allocation5] sm:$0xff] %v25
    // Predicated region
    $region10: #{tpu_custom_call.1} parent=1 // pred_check
      _
    $region11: #{tpu_custom_call.1} parent=1 // pred_check_branch
      %28 = sbr.rel (0) target = $region13
    $region12: #{tpu_custom_call.1} parent=1 // pred_region
      %30 = vsyncadd [#allocation4], 0
      %s32 = sshll.u32 [#allocation5], 4
      %s33 = int_to_ptr.vmem [resolvable:$true] %s32
      %s34 = sshll.u32 %s1, 4
      %s35 = int_to_ptr.hbm [resolvable:$true] %s34
      %37 = dma.vmem_to_hbm [thread:$0]  %s33, 128, %s35, [#allocation4]
    $region13: #{tpu_custom_call.1} parent=1 // pred_fallthru
      _
    // Predicated region
    $region14: #{tpu_custom_call.1} parent=1 // pred_check
      _
    $region15: #{tpu_custom_call.1} parent=1 // pred_check_branch
      %39 = sbr.rel (0) target = $region17
    $region16: #{tpu_custom_call.1} parent=1 // pred_region
      %41 = dma.done [#allocation4], 128
    $region17: #{tpu_custom_call.1} parent=1 // pred_fallthru
      _
    %42 = vsyncpa [#allocation3], 1
    %43 = vsyncpa [#allocation4], 1

</llo_original>
